<compile_context>
chip_gen: v6e
topology: v6e:2x2x1
jax: 0.10.0
libtpu: 0.0.40
codegen_flags: <defaults>
</compile_context>

<pallas_src>
import math
import jax
import jax.numpy as jnp
from jax.experimental import pallas as pl
from jax.experimental.pallas import tpu as pltpu


# -----------------------------------------------------------------------------
# Fused Pallas kernel: pos-encoding + N x (Conv1d + bias + ReLU + skip)
# -----------------------------------------------------------------------------
def _make_fused_kernel(channels, K, B, T):
    n_layers = len(channels) - 1
    pad = K // 2
    Tp = T + 2 * pad

    def kernel(*refs):
        # refs: x2d, emb, (w_0, b_0, ..., w_{L-1}, b_{L-1}), out, xp_scr, xs_scr
        x_ref, emb_ref = refs[0], refs[1]
        w_refs = [refs[2 + 2 * l] for l in range(n_layers)]
        b_refs = [refs[3 + 2 * l] for l in range(n_layers)]
        o_ref = refs[2 + 2 * n_layers]
        xp_scr = refs[3 + 2 * n_layers]   # (Cmax, B*Tp)  padded activation slab
        xs_scr = refs[4 + 2 * n_layers]   # (K*Cmax, B*T) stacked-window slab

        # pos_encoding: x = x + chan_embedding (broadcast over the B*T lanes)
        h = x_ref[...] + emb_ref[...]                       # (C0, B*T), f32

        # Zero the padded slab once: the pad columns of every batch segment are
        # never written again, so they stay zero for all layers.
        xp_scr[...] = jnp.zeros_like(xp_scr)

        for l in range(n_layers):
            cin, cout = channels[l], channels[l + 1]
            is_last = l == n_layers - 1

            # In-VMEM "same" padding: write the current activation into the
            # interior of each batch segment of the padded slab.
            for b in range(B):
                xp_scr[:cin, b * Tp + pad: b * Tp + pad + T] = h[:, b * T:(b + 1) * T]

            # Stack the K shifted windows -> (K*cin, B*T), so the whole conv
            # becomes a single MXU matmul with contraction dim K*cin.
            for k in range(K):
                for b in range(B):
                    xs_scr[k * cin:(k + 1) * cin, b * T:(b + 1) * T] = (
                        xp_scr[:cin, b * Tp + k: b * Tp + k + T])

            w = w_refs[l][...]                              # (cout, K*cin)
            bias = b_refs[l][...]                           # (cout, 1)
            xs = xs_scr[:K * cin, :]                        # (K*cin, B*T)

            # Single matmul per layer; bias folded into the same epilogue pass.
            acc = jnp.dot(w, xs, preferred_element_type=jnp.float32) + bias
            if not is_last:
                acc = jnp.maximum(acc, 0.0)                 # ReLU BEFORE residual
            if cout == cin:                                 # skip connection (shape match)
                acc = acc + h
            h = acc

        o_ref[...] = h.astype(o_ref.dtype)

    return kernel


def pallas_forward(x, params):
    """x: [B, C0, T] -> [B, C_last, T], whole ConvSequence in one pallas_call."""
    B, C0, T = x.shape
    weights, biases = params["weights"], params["biases"]
    channels = (C0,) + tuple(w.shape[0] for w in weights)
    K = weights[0].shape[-1]
    pad = K // 2
    Tp = T + 2 * pad
    Cmax = max(channels)

    # Layout plumbing only (no compute): fold batch into the lane/time axis.
    x2d = jnp.transpose(x, (1, 0, 2)).reshape(C0, B * T)     # (C0, B*T)
    emb2d = params["chan_embedding"].reshape(C0, 1)

    args = [x2d, emb2d]
    for w, b in zip(weights, biases):
        cout, cin, k = w.shape
        # wflat[o, k*cin + c] = w[o, c, k]  -> conv == one matmul over K*Cin
        args.append(jnp.transpose(w, (0, 2, 1)).reshape(cout, k * cin))
        args.append(b.reshape(cout, 1))

    out2d = pl.pallas_call(
        _make_fused_kernel(channels, K, B, T),
        out_shape=jax.ShapeDtypeStruct((channels[-1], B * T), x.dtype),
        scratch_shapes=[
            pltpu.VMEM((Cmax, B * Tp), jnp.float32),         # padded activations
            pltpu.VMEM((K * Cmax, B * T), jnp.float32),      # stacked windows
        ],
    )(*args)

    return jnp.transpose(out2d.reshape(channels[-1], B, T), (1, 0, 2))


# -----------------------------------------------------------------------------
# Pure-JAX reference (mirrors the PyTorch forward)
# -----------------------------------------------------------------------------
def ref_forward(x, params):
    x = x + params["chan_embedding"]
    n = len(params["weights"])
    for k in range(n):
        old_x = x
        w, b = params["weights"][k], params["biases"][k]
        pad = w.shape[-1] // 2
        y = jax.lax.conv_general_dilated(
            x, w, window_strides=(1,), padding=[(pad, pad)],
            dimension_numbers=("NCH", "OIH", "NCH"))
        y = y + b[None, :, None]
        if k != n - 1:
            y = jnp.maximum(y, 0.0)
        if y.shape == old_x.shape:
            y = y + old_x
        x = y
    return x


# -----------------------------------------------------------------------------
# Deterministic parameter init (kaiming_uniform_, a=0; zero bias)
# -----------------------------------------------------------------------------
def init_params(key, channels, kernel):
    params = {"weights": [], "biases": []}
    key, ek = jax.random.split(key)
    bound_e = math.sqrt(2.0) * math.sqrt(3.0 / channels[0])
    params["chan_embedding"] = jax.random.uniform(
        ek, (1, channels[0], 1), jnp.float32, -bound_e, bound_e)
    for chin, chout in zip(channels[:-1], channels[1:]):
        key, wk = jax.random.split(key)
        fan_in = chin * kernel
        bound = math.sqrt(2.0) * math.sqrt(3.0 / fan_in)
        w = jax.random.uniform(wk, (chout, chin, kernel), jnp.float32, -bound, bound)
        params["weights"].append(w)
        params["biases"].append(jnp.zeros((chout,), jnp.float32))
    return params


if __name__ == "__main__":
    CHANNELS = (4, 8, 8, 8)
    KERNEL = 3
    B, T = 2, 16

    key = jax.random.PRNGKey(0)
    key, xk = jax.random.split(key)
    x = jax.random.normal(xk, (B, CHANNELS[0], T), jnp.float32)  # [B, C, T]
    params = init_params(key, CHANNELS, KERNEL)

    out = jax.block_until_ready(pallas_forward(x, params))
    ref = jax.block_until_ready(ref_forward(x, params))

    assert out.shape == (B, CHANNELS[-1], T), out.shape
    err = float(jnp.max(jnp.abs(out - ref)))
    assert jnp.allclose(out, ref, atol=2e-4, rtol=2e-4), err

    print("KERNEL_OK")
</pallas_src>

<mosaic_0001>
module attributes {stable_mosaic.version = 11 : i64} {
  func.func @kernel(%arg0: memref<4x32xf32, #tpu.memory_space<vmem>>, %arg1: memref<4x1xf32, #tpu.memory_space<vmem>>, %arg2: memref<8x12xf32, #tpu.memory_space<vmem>>, %arg3: memref<8x1xf32, #tpu.memory_space<vmem>>, %arg4: memref<8x24xf32, #tpu.memory_space<vmem>>, %arg5: memref<8x1xf32, #tpu.memory_space<vmem>>, %arg6: memref<8x24xf32, #tpu.memory_space<vmem>>, %arg7: memref<8x1xf32, #tpu.memory_space<vmem>>, %arg8: memref<8x32xf32, #tpu.memory_space<vmem>>, %arg9: memref<8x36xf32, #tpu.memory_space<vmem>>, %arg10: memref<24x32xf32, #tpu.memory_space<vmem>>) attributes {dimension_semantics = [], scalar_prefetch = 0 : i64, scratch_operands = 2 : i64, tpu.core_type = #tpu.core_type<tc>} {
    %c0 = arith.constant 0 : index
    %c0_0 = arith.constant 0 : index
    %0 = vector.load %arg0[%c0, %c0_0] : memref<4x32xf32, #tpu.memory_space<vmem>>, vector<4x32xf32>
    %c0_1 = arith.constant 0 : index
    %c0_2 = arith.constant 0 : index
    %1 = vector.load %arg1[%c0_1, %c0_2] : memref<4x1xf32, #tpu.memory_space<vmem>>, vector<4x1xf32>
    %2 = vector.broadcast %1 : vector<4x1xf32> to vector<4x32xf32>
    %3 = arith.addf %0, %2 : vector<4x32xf32>
    %cst = arith.constant 0.000000e+00 : f32
    %4 = vector.broadcast %cst : f32 to vector<8x36xf32>
    %c0_3 = arith.constant 0 : index
    %c0_4 = arith.constant 0 : index
    %5 = vector.load %arg9[%c0_3, %c0_4] : memref<8x36xf32, #tpu.memory_space<vmem>>, vector<8x36xf32>
    tpu.vector_store %arg9[%c0_3, %c0_4], %4 {strides = array<i32>} : memref<8x36xf32, #tpu.memory_space<vmem>>, vector<8x36xf32>,
    %6 = vector.extract_strided_slice %3 {offsets = [0, 0], sizes = [4, 16], strides = [1, 1]} : vector<4x32xf32> to vector<4x16xf32>
    %c0_5 = arith.constant 0 : index
    %c1 = arith.constant 1 : index
    %7 = vector.load %arg9[%c0_5, %c1] : memref<8x36xf32, #tpu.memory_space<vmem>>, vector<4x16xf32>
    tpu.vector_store %arg9[%c0_5, %c1], %6 {strides = array<i32>} : memref<8x36xf32, #tpu.memory_space<vmem>>, vector<4x16xf32>,
    %8 = vector.extract_strided_slice %3 {offsets = [0, 16], sizes = [4, 16], strides = [1, 1]} : vector<4x32xf32> to vector<4x16xf32>
    %c0_6 = arith.constant 0 : index
    %c19 = arith.constant 19 : index
    %9 = vector.load %arg9[%c0_6, %c19] : memref<8x36xf32, #tpu.memory_space<vmem>>, vector<4x16xf32>
    tpu.vector_store %arg9[%c0_6, %c19], %8 {strides = array<i32>} : memref<8x36xf32, #tpu.memory_space<vmem>>, vector<4x16xf32>,
    %c0_7 = arith.constant 0 : index
    %c0_8 = arith.constant 0 : index
    %10 = vector.load %arg9[%c0_7, %c0_8] : memref<8x36xf32, #tpu.memory_space<vmem>>, vector<4x16xf32>
    %c0_9 = arith.constant 0 : index
    %c0_10 = arith.constant 0 : index
    %11 = vector.load %arg10[%c0_9, %c0_10] : memref<24x32xf32, #tpu.memory_space<vmem>>, vector<4x16xf32>
    tpu.vector_store %arg10[%c0_9, %c0_10], %10 {strides = array<i32>} : memref<24x32xf32, #tpu.memory_space<vmem>>, vector<4x16xf32>,
    %c0_11 = arith.constant 0 : index
    %c18 = arith.constant 18 : index
    %12 = vector.load %arg9[%c0_11, %c18] : memref<8x36xf32, #tpu.memory_space<vmem>>, vector<4x16xf32>
    %c0_12 = arith.constant 0 : index
    %c16 = arith.constant 16 : index
    %13 = vector.load %arg10[%c0_12, %c16] : memref<24x32xf32, #tpu.memory_space<vmem>>, vector<4x16xf32>
    tpu.vector_store %arg10[%c0_12, %c16], %12 {strides = array<i32>} : memref<24x32xf32, #tpu.memory_space<vmem>>, vector<4x16xf32>,
    %c0_13 = arith.constant 0 : index
    %c1_14 = arith.constant 1 : index
    %14 = vector.load %arg9[%c0_13, %c1_14] : memref<8x36xf32, #tpu.memory_space<vmem>>, vector<4x16xf32>
    %c4 = arith.constant 4 : index
    %c0_15 = arith.constant 0 : index
    %15 = vector.load %arg10[%c4, %c0_15] : memref<24x32xf32, #tpu.memory_space<vmem>>, vector<4x16xf32>
    tpu.vector_store %arg10[%c4, %c0_15], %14 {strides = array<i32>} : memref<24x32xf32, #tpu.memory_space<vmem>>, vector<4x16xf32>,
    %c0_16 = arith.constant 0 : index
    %c19_17 = arith.constant 19 : index
    %16 = vector.load %arg9[%c0_16, %c19_17] : memref<8x36xf32, #tpu.memory_space<vmem>>, vector<4x16xf32>
    %c4_18 = arith.constant 4 : index
    %c16_19 = arith.constant 16 : index
    %17 = vector.load %arg10[%c4_18, %c16_19] : memref<24x32xf32, #tpu.memory_space<vmem>>, vector<4x16xf32>
    tpu.vector_store %arg10[%c4_18, %c16_19], %16 {strides = array<i32>} : memref<24x32xf32, #tpu.memory_space<vmem>>, vector<4x16xf32>,
    %c0_20 = arith.constant 0 : index
    %c2 = arith.constant 2 : index
    %18 = vector.load %arg9[%c0_20, %c2] : memref<8x36xf32, #tpu.memory_space<vmem>>, vector<4x16xf32>
    %c8 = arith.constant 8 : index
    %c0_21 = arith.constant 0 : index
    %19 = vector.load %arg10[%c8, %c0_21] : memref<24x32xf32, #tpu.memory_space<vmem>>, vector<4x16xf32>
    tpu.vector_store %arg10[%c8, %c0_21], %18 {strides = array<i32>} : memref<24x32xf32, #tpu.memory_space<vmem>>, vector<4x16xf32>,
    %c0_22 = arith.constant 0 : index
    %c20 = arith.constant 20 : index
    %20 = vector.load %arg9[%c0_22, %c20] : memref<8x36xf32, #tpu.memory_space<vmem>>, vector<4x16xf32>
    %c8_23 = arith.constant 8 : index
    %c16_24 = arith.constant 16 : index
    %21 = vector.load %arg10[%c8_23, %c16_24] : memref<24x32xf32, #tpu.memory_space<vmem>>, vector<4x16xf32>
    tpu.vector_store %arg10[%c8_23, %c16_24], %20 {strides = array<i32>} : memref<24x32xf32, #tpu.memory_space<vmem>>, vector<4x16xf32>,
    %c0_25 = arith.constant 0 : index
    %c0_26 = arith.constant 0 : index
    %22 = vector.load %arg2[%c0_25, %c0_26] : memref<8x12xf32, #tpu.memory_space<vmem>>, vector<8x12xf32>
    %c0_27 = arith.constant 0 : index
    %c0_28 = arith.constant 0 : index
    %23 = vector.load %arg3[%c0_27, %c0_28] : memref<8x1xf32, #tpu.memory_space<vmem>>, vector<8x1xf32>
    %c0_29 = arith.constant 0 : index
    %c0_30 = arith.constant 0 : index
    %24 = vector.load %arg10[%c0_29, %c0_30] : memref<24x32xf32, #tpu.memory_space<vmem>>, vector<12x32xf32>
    %cst_31 = arith.constant dense<0.000000e+00> : vector<8x32xf32>
    %25 = tpu.matmul %22, %24, %cst_31 {dimension_numbers = #tpu.dot_dimension_numbers<[1], [0], [0], [1], [0, 0, 1, 1], [], []>} : vector<8x12xf32>, vector<12x32xf32>, vector<8x32xf32> -> vector<8x32xf32>
    %26 = vector.broadcast %23 : vector<8x1xf32> to vector<8x32xf32>
    %27 = arith.addf %25, %26 : vector<8x32xf32>
    %cst_32 = arith.constant 0.000000e+00 : f32
    %28 = vector.broadcast %cst_32 : f32 to vector<8x32xf32>
    %29 = arith.maximumf %27, %28 : vector<8x32xf32>
    %30 = vector.extract_strided_slice %29 {offsets = [0, 0], sizes = [8, 16], strides = [1, 1]} : vector<8x32xf32> to vector<8x16xf32>
    %c0_33 = arith.constant 0 : index
    %c1_34 = arith.constant 1 : index
    %31 = vector.load %arg9[%c0_33, %c1_34] : memref<8x36xf32, #tpu.memory_space<vmem>>, vector<8x16xf32>
    tpu.vector_store %arg9[%c0_33, %c1_34], %30 {strides = array<i32>} : memref<8x36xf32, #tpu.memory_space<vmem>>, vector<8x16xf32>,
    %32 = vector.extract_strided_slice %29 {offsets = [0, 16], sizes = [8, 16], strides = [1, 1]} : vector<8x32xf32> to vector<8x16xf32>
    %c0_35 = arith.constant 0 : index
    %c19_36 = arith.constant 19 : index
    %33 = vector.load %arg9[%c0_35, %c19_36] : memref<8x36xf32, #tpu.memory_space<vmem>>, vector<8x16xf32>
    tpu.vector_store %arg9[%c0_35, %c19_36], %32 {strides = array<i32>} : memref<8x36xf32, #tpu.memory_space<vmem>>, vector<8x16xf32>,
    %c0_37 = arith.constant 0 : index
    %c0_38 = arith.constant 0 : index
    %34 = vector.load %arg9[%c0_37, %c0_38] : memref<8x36xf32, #tpu.memory_space<vmem>>, vector<8x16xf32>
    %c0_39 = arith.constant 0 : index
    %c0_40 = arith.constant 0 : index
    %35 = vector.load %arg10[%c0_39, %c0_40] : memref<24x32xf32, #tpu.memory_space<vmem>>, vector<8x16xf32>
    tpu.vector_store %arg10[%c0_39, %c0_40], %34 {strides = array<i32>} : memref<24x32xf32, #tpu.memory_space<vmem>>, vector<8x16xf32>,
    %c0_41 = arith.constant 0 : index
    %c18_42 = arith.constant 18 : index
    %36 = vector.load %arg9[%c0_41, %c18_42] : memref<8x36xf32, #tpu.memory_space<vmem>>, vector<8x16xf32>
    %c0_43 = arith.constant 0 : index
    %c16_44 = arith.constant 16 : index
    %37 = vector.load %arg10[%c0_43, %c16_44] : memref<24x32xf32, #tpu.memory_space<vmem>>, vector<8x16xf32>
    tpu.vector_store %arg10[%c0_43, %c16_44], %36 {strides = array<i32>} : memref<24x32xf32, #tpu.memory_space<vmem>>, vector<8x16xf32>,
    %c0_45 = arith.constant 0 : index
    %c1_46 = arith.constant 1 : index
    %38 = vector.load %arg9[%c0_45, %c1_46] : memref<8x36xf32, #tpu.memory_space<vmem>>, vector<8x16xf32>
    %c8_47 = arith.constant 8 : index
    %c0_48 = arith.constant 0 : index
    %39 = vector.load %arg10[%c8_47, %c0_48] : memref<24x32xf32, #tpu.memory_space<vmem>>, vector<8x16xf32>
    tpu.vector_store %arg10[%c8_47, %c0_48], %38 {strides = array<i32>} : memref<24x32xf32, #tpu.memory_space<vmem>>, vector<8x16xf32>,
    %c0_49 = arith.constant 0 : index
    %c19_50 = arith.constant 19 : index
    %40 = vector.load %arg9[%c0_49, %c19_50] : memref<8x36xf32, #tpu.memory_space<vmem>>, vector<8x16xf32>
    %c8_51 = arith.constant 8 : index
    %c16_52 = arith.constant 16 : index
    %41 = vector.load %arg10[%c8_51, %c16_52] : memref<24x32xf32, #tpu.memory_space<vmem>>, vector<8x16xf32>
    tpu.vector_store %arg10[%c8_51, %c16_52], %40 {strides = array<i32>} : memref<24x32xf32, #tpu.memory_space<vmem>>, vector<8x16xf32>,
    %c0_53 = arith.constant 0 : index
    %c2_54 = arith.constant 2 : index
    %42 = vector.load %arg9[%c0_53, %c2_54] : memref<8x36xf32, #tpu.memory_space<vmem>>, vector<8x16xf32>
    %c16_55 = arith.constant 16 : index
    %c0_56 = arith.constant 0 : index
    %43 = vector.load %arg10[%c16_55, %c0_56] : memref<24x32xf32, #tpu.memory_space<vmem>>, vector<8x16xf32>
    tpu.vector_store %arg10[%c16_55, %c0_56], %42 {strides = array<i32>} : memref<24x32xf32, #tpu.memory_space<vmem>>, vector<8x16xf32>,
    %c0_57 = arith.constant 0 : index
    %c20_58 = arith.constant 20 : index
    %44 = vector.load %arg9[%c0_57, %c20_58] : memref<8x36xf32, #tpu.memory_space<vmem>>, vector<8x16xf32>
    %c16_59 = arith.constant 16 : index
    %c16_60 = arith.constant 16 : index
    %45 = vector.load %arg10[%c16_59, %c16_60] : memref<24x32xf32, #tpu.memory_space<vmem>>, vector<8x16xf32>
    tpu.vector_store %arg10[%c16_59, %c16_60], %44 {strides = array<i32>} : memref<24x32xf32, #tpu.memory_space<vmem>>, vector<8x16xf32>,
    %c0_61 = arith.constant 0 : index
    %c0_62 = arith.constant 0 : index
    %46 = vector.load %arg4[%c0_61, %c0_62] : memref<8x24xf32, #tpu.memory_space<vmem>>, vector<8x24xf32>
    %c0_63 = arith.constant 0 : index
    %c0_64 = arith.constant 0 : index
    %47 = vector.load %arg5[%c0_63, %c0_64] : memref<8x1xf32, #tpu.memory_space<vmem>>, vector<8x1xf32>
    %c0_65 = arith.constant 0 : index
    %c0_66 = arith.constant 0 : index
    %48 = vector.load %arg10[%c0_65, %c0_66] : memref<24x32xf32, #tpu.memory_space<vmem>>, vector<24x32xf32>
    %cst_67 = arith.constant dense<0.000000e+00> : vector<8x32xf32>
    %49 = tpu.matmul %46, %48, %cst_67 {dimension_numbers = #tpu.dot_dimension_numbers<[1], [0], [0], [1], [0, 0, 1, 1], [], []>} : vector<8x24xf32>, vector<24x32xf32>, vector<8x32xf32> -> vector<8x32xf32>
    %50 = vector.broadcast %47 : vector<8x1xf32> to vector<8x32xf32>
    %51 = arith.addf %49, %50 : vector<8x32xf32>
    %cst_68 = arith.constant 0.000000e+00 : f32
    %52 = vector.broadcast %cst_68 : f32 to vector<8x32xf32>
    %53 = arith.maximumf %51, %52 : vector<8x32xf32>
    %54 = arith.addf %53, %29 : vector<8x32xf32>
    %55 = vector.extract_strided_slice %54 {offsets = [0, 0], sizes = [8, 16], strides = [1, 1]} : vector<8x32xf32> to vector<8x16xf32>
    %c0_69 = arith.constant 0 : index
    %c1_70 = arith.constant 1 : index
    %56 = vector.load %arg9[%c0_69, %c1_70] : memref<8x36xf32, #tpu.memory_space<vmem>>, vector<8x16xf32>
    tpu.vector_store %arg9[%c0_69, %c1_70], %55 {strides = array<i32>} : memref<8x36xf32, #tpu.memory_space<vmem>>, vector<8x16xf32>,
    %57 = vector.extract_strided_slice %54 {offsets = [0, 16], sizes = [8, 16], strides = [1, 1]} : vector<8x32xf32> to vector<8x16xf32>
    %c0_71 = arith.constant 0 : index
    %c19_72 = arith.constant 19 : index
    %58 = vector.load %arg9[%c0_71, %c19_72] : memref<8x36xf32, #tpu.memory_space<vmem>>, vector<8x16xf32>
    tpu.vector_store %arg9[%c0_71, %c19_72], %57 {strides = array<i32>} : memref<8x36xf32, #tpu.memory_space<vmem>>, vector<8x16xf32>,
    %c0_73 = arith.constant 0 : index
    %c0_74 = arith.constant 0 : index
    %59 = vector.load %arg9[%c0_73, %c0_74] : memref<8x36xf32, #tpu.memory_space<vmem>>, vector<8x16xf32>
    %c0_75 = arith.constant 0 : index
    %c0_76 = arith.constant 0 : index
    %60 = vector.load %arg10[%c0_75, %c0_76] : memref<24x32xf32, #tpu.memory_space<vmem>>, vector<8x16xf32>
    tpu.vector_store %arg10[%c0_75, %c0_76], %59 {strides = array<i32>} : memref<24x32xf32, #tpu.memory_space<vmem>>, vector<8x16xf32>,
    %c0_77 = arith.constant 0 : index
    %c18_78 = arith.constant 18 : index
    %61 = vector.load %arg9[%c0_77, %c18_78] : memref<8x36xf32, #tpu.memory_space<vmem>>, vector<8x16xf32>
    %c0_79 = arith.constant 0 : index
    %c16_80 = arith.constant 16 : index
    %62 = vector.load %arg10[%c0_79, %c16_80] : memref<24x32xf32, #tpu.memory_space<vmem>>, vector<8x16xf32>
    tpu.vector_store %arg10[%c0_79, %c16_80], %61 {strides = array<i32>} : memref<24x32xf32, #tpu.memory_space<vmem>>, vector<8x16xf32>,
    %c0_81 = arith.constant 0 : index
    %c1_82 = arith.constant 1 : index
    %63 = vector.load %arg9[%c0_81, %c1_82] : memref<8x36xf32, #tpu.memory_space<vmem>>, vector<8x16xf32>
    %c8_83 = arith.constant 8 : index
    %c0_84 = arith.constant 0 : index
    %64 = vector.load %arg10[%c8_83, %c0_84] : memref<24x32xf32, #tpu.memory_space<vmem>>, vector<8x16xf32>
    tpu.vector_store %arg10[%c8_83, %c0_84], %63 {strides = array<i32>} : memref<24x32xf32, #tpu.memory_space<vmem>>, vector<8x16xf32>,
    %c0_85 = arith.constant 0 : index
    %c19_86 = arith.constant 19 : index
    %65 = vector.load %arg9[%c0_85, %c19_86] : memref<8x36xf32, #tpu.memory_space<vmem>>, vector<8x16xf32>
    %c8_87 = arith.constant 8 : index
    %c16_88 = arith.constant 16 : index
    %66 = vector.load %arg10[%c8_87, %c16_88] : memref<24x32xf32, #tpu.memory_space<vmem>>, vector<8x16xf32>
    tpu.vector_store %arg10[%c8_87, %c16_88], %65 {strides = array<i32>} : memref<24x32xf32, #tpu.memory_space<vmem>>, vector<8x16xf32>,
    %c0_89 = arith.constant 0 : index
    %c2_90 = arith.constant 2 : index
    %67 = vector.load %arg9[%c0_89, %c2_90] : memref<8x36xf32, #tpu.memory_space<vmem>>, vector<8x16xf32>
    %c16_91 = arith.constant 16 : index
    %c0_92 = arith.constant 0 : index
    %68 = vector.load %arg10[%c16_91, %c0_92] : memref<24x32xf32, #tpu.memory_space<vmem>>, vector<8x16xf32>
    tpu.vector_store %arg10[%c16_91, %c0_92], %67 {strides = array<i32>} : memref<24x32xf32, #tpu.memory_space<vmem>>, vector<8x16xf32>,
    %c0_93 = arith.constant 0 : index
    %c20_94 = arith.constant 20 : index
    %69 = vector.load %arg9[%c0_93, %c20_94] : memref<8x36xf32, #tpu.memory_space<vmem>>, vector<8x16xf32>
    %c16_95 = arith.constant 16 : index
    %c16_96 = arith.constant 16 : index
    %70 = vector.load %arg10[%c16_95, %c16_96] : memref<24x32xf32, #tpu.memory_space<vmem>>, vector<8x16xf32>
    tpu.vector_store %arg10[%c16_95, %c16_96], %69 {strides = array<i32>} : memref<24x32xf32, #tpu.memory_space<vmem>>, vector<8x16xf32>,
    %c0_97 = arith.constant 0 : index
    %c0_98 = arith.constant 0 : index
    %71 = vector.load %arg6[%c0_97, %c0_98] : memref<8x24xf32, #tpu.memory_space<vmem>>, vector<8x24xf32>
    %c0_99 = arith.constant 0 : index
    %c0_100 = arith.constant 0 : index
    %72 = vector.load %arg7[%c0_99, %c0_100] : memref<8x1xf32, #tpu.memory_space<vmem>>, vector<8x1xf32>
    %c0_101 = arith.constant 0 : index
    %c0_102 = arith.constant 0 : index
    %73 = vector.load %arg10[%c0_101, %c0_102] : memref<24x32xf32, #tpu.memory_space<vmem>>, vector<24x32xf32>
    %cst_103 = arith.constant dense<0.000000e+00> : vector<8x32xf32>
    %74 = tpu.matmul %71, %73, %cst_103 {dimension_numbers = #tpu.dot_dimension_numbers<[1], [0], [0], [1], [0, 0, 1, 1], [], []>} : vector<8x24xf32>, vector<24x32xf32>, vector<8x32xf32> -> vector<8x32xf32>
    %75 = vector.broadcast %72 : vector<8x1xf32> to vector<8x32xf32>
    %76 = arith.addf %74, %75 : vector<8x32xf32>
    %77 = arith.addf %76, %54 : vector<8x32xf32>
    %c0_104 = arith.constant 0 : index
    %c0_105 = arith.constant 0 : index
    %78 = vector.load %arg8[%c0_104, %c0_105] : memref<8x32xf32, #tpu.memory_space<vmem>>, vector<8x32xf32>
    tpu.vector_store %arg8[%c0_104, %c0_105], %77 {strides = array<i32>} : memref<8x32xf32, #tpu.memory_space<vmem>>, vector<8x32xf32>,
    return
  }
}

</mosaic_0001>

<llo_original>
// kernel: tpu_custom_call.1
$region0: #{tpu_custom_call.1}
  #allocation0 [shape = 'u32[]', space=smem, size = 0x4, offset = 0x4, fixed_abs, tag = 'smem constant byte address 0x4 - core index']
  #allocation1 [shape = 'u32[144,128]{1,0:T(1,128)}', space=vmem, size = 0x12000, scoped, tag = 'internal scratch']
  #allocation2 [shape = 'f32[8,36]{1,0:T(8,128)}', space=vmem, size = 0x1000, scoped, tag = 'scratch operand']
  #allocation3 [shape = 'f32[24,32]{1,0:T(8,128)}', space=vmem, size = 0x3000, scoped, tag = 'scratch operand']
  %s0 = inlined_call_operand.vmem [shape: f32[4,32], index: 0, kind: input, shape index: {}]
  %s1 = inlined_call_operand.vmem [shape: f32[4,1], index: 1, kind: input, shape index: {}]
  %s2 = inlined_call_operand.vmem [shape: f32[8,12], index: 2, kind: input, shape index: {}]
  %s3 = inlined_call_operand.vmem [shape: f32[8,1], index: 3, kind: input, shape index: {}]
  %s4 = inlined_call_operand.vmem [shape: f32[8,24], index: 4, kind: input, shape index: {}]
  %s5 = inlined_call_operand.vmem [shape: f32[8,1], index: 5, kind: input, shape index: {}]
  %s6 = inlined_call_operand.vmem [shape: f32[8,24], index: 6, kind: input, shape index: {}]
  %s7 = inlined_call_operand.vmem [shape: f32[8,1], index: 7, kind: input, shape index: {}]
  %s8 = inlined_call_operand.hbm [shape: f32[8,32], index: 8, kind: output, shape index: {}]
  %s9 = sld [smem:[#allocation0]]
  $region42: #{tpu_custom_call.1} parent=0
    _
  %s11 = ssub.s32 1, %s9
  %s12 = scalar_select 0, %s11, %s9
  $region1: #{tpu_custom_call.1} parent=0
    #allocation4 [shape = 'u8[4096]{0}', space=vmem, size = 0x1000, scoped, tag = 'output window, operand 0, single buffered']
    #allocation5 [shape = 's32[1]{0}', space=sflag, size = 0x4, scoped, tag = 'scoped memory for tpu_custom_call.1']
    %13 = vsyncpa [#allocation5], 0
    // Predicated region
    $region2: #{tpu_custom_call.1} parent=1 // pred_check
      _
    $region3: #{tpu_custom_call.1} parent=1 // pred_check_branch
      %15 = sbr.rel (0) target = $region5
    $region4: #{tpu_custom_call.1} parent=1 // pred_region
      _
    $region5: #{tpu_custom_call.1} parent=1 // pred_fallthru
      _
    // Predicated region
    $region6: #{tpu_custom_call.1} parent=1 // pred_check
      _
    $region7: #{tpu_custom_call.1} parent=1 // pred_check_branch
      %17 = sbr.rel (0) target = $region9
    $region8: #{tpu_custom_call.1} parent=1 // pred_region
      _
    $region9: #{tpu_custom_call.1} parent=1 // pred_fallthru
      _
    // Predicated region
    $region10: #{tpu_custom_call.1} parent=1 // pred_check
      _
    $region11: #{tpu_custom_call.1} parent=1 // pred_check_branch
      %19 = sbr.rel (0) target = $region13
    $region12: #{tpu_custom_call.1} parent=1 // pred_region
      _
    $region13: #{tpu_custom_call.1} parent=1 // pred_fallthru
      _
    // Predicated region
    $region14: #{tpu_custom_call.1} parent=1 // pred_check
      _
    $region15: #{tpu_custom_call.1} parent=1 // pred_check_branch
      %21 = sbr.rel (0) target = $region17
    $region16: #{tpu_custom_call.1} parent=1 // pred_region
      _
    $region17: #{tpu_custom_call.1} parent=1 // pred_fallthru
      _
    // Predicated region
    $region18: #{tpu_custom_call.1} parent=1 // pred_check
      _
    $region19: #{tpu_custom_call.1} parent=1 // pred_check_branch
      %23 = sbr.rel (0) target = $region21
    $region20: #{tpu_custom_call.1} parent=1 // pred_region
      _
    $region21: #{tpu_custom_call.1} parent=1 // pred_fallthru
      _
    // Predicated region
    $region22: #{tpu_custom_call.1} parent=1 // pred_check
      _
    $region23: #{tpu_custom_call.1} parent=1 // pred_check_branch
      %25 = sbr.rel (0) target = $region25
    $region24: #{tpu_custom_call.1} parent=1 // pred_region
      _
    $region25: #{tpu_custom_call.1} parent=1 // pred_fallthru
      _
    // Predicated region
    $region26: #{tpu_custom_call.1} parent=1 // pred_check
      _
    $region27: #{tpu_custom_call.1} parent=1 // pred_check_branch
      %27 = sbr.rel (0) target = $region29
    $region28: #{tpu_custom_call.1} parent=1 // pred_region
      _
    $region29: #{tpu_custom_call.1} parent=1 // pred_fallthru
      _
    // Predicated region
    $region30: #{tpu_custom_call.1} parent=1 // pred_check
      _
    $region31: #{tpu_custom_call.1} parent=1 // pred_check_branch
      %29 = sbr.rel (0) target = $region33
    $region32: #{tpu_custom_call.1} parent=1 // pred_region
      _
    $region33: #{tpu_custom_call.1} parent=1 // pred_fallthru
      _
    %v30 = vld [vmem:[%s0] sm:$0xf]
    %v31 = vld [vmem:[%s1] sm:$0xf]
    %33 = vset.pattern.permute.xlu0 0
    %34 = vperm.xlu0 %33, %v31
    %v35 = vpop.permute.xlu0 %34
    %v37 = vadd.f32 %v30, %v35
    %vm38 = vcmask 293888
    %39 = vst.msk [vmem:[#allocation2] sm:$0xff] %vm38, 0.0
    %41 = vrot.lane.b32.xlu0 %v37, 1
    %v42 = vpop.permute.xlu0 %41
    %vm44 = vcmask 134152
    %45 = vst.msk [vmem:[#allocation2] sm:$0xf] %vm44, %v42
    %46 = vrot.lane.b32.xlu0 %v37, 3
    %v47 = vpop.permute.xlu0 %46
    %vm49 = vcmask 281752
    %50 = vst.msk [vmem:[#allocation2] sm:$0xf] %vm49, %v47
    %v51 = vld [vmem:[#allocation2] sm:$0xf]
    %vm52 = vcmask 125952
    %53 = vst.msk [vmem:[#allocation3] sm:$0xf] %vm52, %v51
    %v54 = vld [vmem:[#allocation2] sm:$0xf]
    %56 = vrot.lane.b32.xlu0 %v54, 126
    %v57 = vpop.permute.xlu0 %56
    %vm59 = vcmask 257152
    %60 = vst.msk [vmem:[#allocation3] sm:$0xf] %vm59, %v57
    %v61 = vld [vmem:[#allocation2] sm:$0xf]
    %63 = vrot.lane.b32.xlu0 %v61, 127
    %v64 = vpop.permute.xlu0 %63
    %66 = vst.msk [vmem:[#allocation3 + $0x4] sm:$0xf] %vm52, %v64
    %v67 = vld [vmem:[#allocation2] sm:$0xf]
    %69 = vrot.lane.b32.xlu0 %v67, 125
    %v70 = vpop.permute.xlu0 %69
    %72 = vst.msk [vmem:[#allocation3 + $0x4] sm:$0xf] %vm59, %v70
    %v73 = vld [vmem:[#allocation2] sm:$0xf]
    %75 = vrot.lane.b32.xlu0 %v73, 126
    %v76 = vpop.permute.xlu0 %75
    %78 = vst.msk [vmem:[#allocation3 + $0x8] sm:$0xf] %vm52, %v76
    %v79 = vld [vmem:[#allocation2] sm:$0xf]
    %81 = vrot.lane.b32.xlu0 %v79, 124
    %v82 = vpop.permute.xlu0 %81
    %84 = vst.msk [vmem:[#allocation3 + $0x8] sm:$0xf] %vm59, %v82
    %v85 = vld [vmem:[%s2] sm:$0xff]
    %v86 = vld [vmem:[%s3] sm:$0xff]
    %v87 = vld [vmem:[#allocation3] sm:$0xff]
    %v88 = vld [vmem:[#allocation3 + $0x8] sm:$0xf]
    %90 = vset.pattern.permute.xlu0 0
    %91 = vperm.xlu0 %90, %v86
    %v92 = vpop.permute.xlu0 %91
    %vm94 = vcmask 97280
    %v96 = vsel %vm94, %v85, 0
    %vm98 = vcmask 1043456
    %v100 = vsel %vm98, %v88, 0
    %102 = vmatprep.subr.mxu0 0.0
    %103 = vmatpush1.msra.mxu0 0.0
    %104 = vmatprep.subr.mxu0 0.0
    %105 = vmatpush1.msra.mxu0 0.0
    %106 = vmatprep.subr.mxu0 0.0
    %107 = vmatpush1.msra.mxu0 0.0
    %108 = vmatprep.subr.mxu0 0.0
    %109 = vmatpush1.msra.mxu0 0.0
    %110 = vmatprep.subr.mxu0 0.0
    %111 = vmatpush1.msra.mxu0 0.0
    %112 = vmatprep.subr.mxu0 0.0
    %113 = vmatpush1.msra.mxu0 0.0
    %114 = vmatprep.subr.mxu0 0.0
    %115 = vmatpush1.msra.mxu0 0.0
    %116 = vmatprep.subr.mxu0 0.0
    %117 = vmatpush1.msra.mxu0 0.0
    %118 = vmatprep.subr.mxu0 0.0
    %119 = vmatpush1.msra.mxu0 0.0
    %120 = vmatprep.subr.mxu0 0.0
    %121 = vmatpush1.msra.mxu0 0.0
    %122 = vmatprep.subr.mxu0 0.0
    %123 = vmatpush1.msra.mxu0 0.0
    %124 = vmatprep.subr.mxu0 0.0
    %125 = vmatpush1.msra.mxu0 0.0
    %126 = vmatprep.subr.mxu0 0.0
    %127 = vmatpush1.msra.mxu0 0.0
    %128 = vmatprep.subr.mxu0 0.0
    %129 = vmatpush1.msra.mxu0 0.0
    %130 = vmatprep.subr.mxu0 0.0
    %131 = vmatpush1.msra.mxu0 %v100
    %132 = vmatprep.subr.mxu0 0.0
    %133 = vmatpush1.msra.mxu0 %v87
    %134 = vmatprep.subr.mxu0 0.0
    %135 = vmatpush2.msra.mxu0 0.0
    %136 = vmatprep.subr.mxu0 0.0
    %137 = vmatpush2.msra.mxu0 0.0
    %138 = vmatprep.subr.mxu0 0.0
    %139 = vmatpush2.msra.mxu0 0.0
    %140 = vmatprep.subr.mxu0 0.0
    %141 = vmatpush2.msra.mxu0 0.0
    %142 = vmatprep.subr.mxu0 0.0
    %143 = vmatpush2.msra.mxu0 0.0
    %144 = vmatprep.subr.mxu0 0.0
    %145 = vmatpush2.msra.mxu0 0.0
    %146 = vmatprep.subr.mxu0 0.0
    %147 = vmatpush2.msra.mxu0 0.0
    %148 = vmatprep.subr.mxu0 0.0
    %149 = vmatpush2.msra.mxu0 0.0
    %150 = vmatprep.subr.mxu0 0.0
    %151 = vmatpush2.msra.mxu0 0.0
    %152 = vmatprep.subr.mxu0 0.0
    %153 = vmatpush2.msra.mxu0 0.0
    %154 = vmatprep.subr.mxu0 0.0
    %155 = vmatpush2.msra.mxu0 0.0
    %156 = vmatprep.subr.mxu0 0.0
    %157 = vmatpush2.msra.mxu0 0.0
    %158 = vmatprep.subr.mxu0 0.0
    %159 = vmatpush2.msra.mxu0 0.0
    %160 = vmatprep.subr.mxu0 0.0
    %161 = vmatpush2.msra.mxu0 0.0
    %162 = vmatprep.subr.mxu0 0.0
    %163 = vmatpush2.msra.mxu0 0.0
    %164 = vmatprep.subr.mxu0 0.0
    %165 = vmatpush2.msra.mxu0 0.0
    %166 = vmatprep.mubr.f32.mxu0 0.0
    %167 = vmatmul.mubr.f32.gmra.mxu0 %v96
    %v168 = vpop.f32.mrf.mxu0
    %v169 = vadd.f32 %v92, %v168
    %v170 = vpop.f32.mrf.mxu0
    %171 = vdwg.mxu0
    %v172 = vmax.f32 %v169, 0.0
    %174 = vrot.lane.b32.xlu0 %v172, 1
    %v175 = vpop.permute.xlu0 %174
    %vm177 = vcmask 138248
    %178 = vst.msk [vmem:[#allocation2] sm:$0xff] %vm177, %v175
    %179 = vrot.lane.b32.xlu0 %v172, 3
    %v180 = vpop.permute.xlu0 %179
    %vm182 = vcmask 285848
    %183 = vst.msk [vmem:[#allocation2] sm:$0xff] %vm182, %v180
    %v184 = vld [vmem:[#allocation2] sm:$0xff]
    %vm185 = vcmask 130048
    %186 = vst.msk [vmem:[#allocation3] sm:$0xff] %vm185, %v184
    %v187 = vld [vmem:[#allocation2] sm:$0xff]
    %189 = vrot.lane.b32.xlu0 %v187, 126
    %v190 = vpop.permute.xlu0 %189
    %vm192 = vcmask 261248
    %193 = vst.msk [vmem:[#allocation3] sm:$0xff] %vm192, %v190
    %v194 = vld [vmem:[#allocation2] sm:$0xff]
    %196 = vrot.lane.b32.xlu0 %v194, 127
    %v197 = vpop.permute.xlu0 %196
    %199 = vst.msk [vmem:[#allocation3 + $0x8] sm:$0xff] %vm185, %v197
    %v200 = vld [vmem:[#allocation2] sm:$0xff]
    %202 = vrot.lane.b32.xlu0 %v200, 125
    %v203 = vpop.permute.xlu0 %202
    %205 = vst.msk [vmem:[#allocation3 + $0x8] sm:$0xff] %vm192, %v203
    %v206 = vld [vmem:[#allocation2] sm:$0xff]
    %208 = vrot.lane.b32.xlu0 %v206, 126
    %v209 = vpop.permute.xlu0 %208
    %211 = vst.msk [vmem:[#allocation3 + $0x10] sm:$0xff] %vm185, %v209
    %v212 = vld [vmem:[#allocation2] sm:$0xff]
    %214 = vrot.lane.b32.xlu0 %v212, 124
    %v215 = vpop.permute.xlu0 %214
    %217 = vst.msk [vmem:[#allocation3 + $0x10] sm:$0xff] %vm192, %v215
    %v218 = vld [vmem:[%s4] sm:$0xff]
    %v219 = vld [vmem:[%s5] sm:$0xff]
    %v220 = vld [vmem:[#allocation3] sm:$0xff]
    %v221 = vld [vmem:[#allocation3 + $0x8] sm:$0xff]
    %v222 = vld [vmem:[#allocation3 + $0x10] sm:$0xff]
    %224 = vset.pattern.permute.xlu0 0
    %225 = vperm.xlu0 %224, %v219
    %v226 = vpop.permute.xlu0 %225
    %vm228 = vcmask 195584
    %v230 = vsel %vm228, %v218, 0
    %232 = vmatprep.subr.mxu0 0.0
    %233 = vmatpush1.msra.mxu0 0.0
    %234 = vmatprep.subr.mxu0 0.0
    %235 = vmatpush1.msra.mxu0 0.0
    %236 = vmatprep.subr.mxu0 0.0
    %237 = vmatpush1.msra.mxu0 0.0
    %238 = vmatprep.subr.mxu0 0.0
    %239 = vmatpush1.msra.mxu0 0.0
    %240 = vmatprep.subr.mxu0 0.0
    %241 = vmatpush1.msra.mxu0 0.0
    %242 = vmatprep.subr.mxu0 0.0
    %243 = vmatpush1.msra.mxu0 0.0
    %244 = vmatprep.subr.mxu0 0.0
    %245 = vmatpush1.msra.mxu0 0.0
    %246 = vmatprep.subr.mxu0 0.0
    %247 = vmatpush1.msra.mxu0 0.0
    %248 = vmatprep.subr.mxu0 0.0
    %249 = vmatpush1.msra.mxu0 0.0
    %250 = vmatprep.subr.mxu0 0.0
    %251 = vmatpush1.msra.mxu0 0.0
    %252 = vmatprep.subr.mxu0 0.0
    %253 = vmatpush1.msra.mxu0 0.0
    %254 = vmatprep.subr.mxu0 0.0
    %255 = vmatpush1.msra.mxu0 0.0
    %256 = vmatprep.subr.mxu0 0.0
    %257 = vmatpush1.msra.mxu0 0.0
    %258 = vmatprep.subr.mxu0 0.0
    %259 = vmatpush1.msra.mxu0 %v222
    %260 = vmatprep.subr.mxu0 0.0
    %261 = vmatpush1.msra.mxu0 %v221
    %262 = vmatprep.subr.mxu0 0.0
    %263 = vmatpush1.msra.mxu0 %v220
    %264 = vmatprep.subr.mxu0 0.0
    %265 = vmatpush2.msra.mxu0 0.0
    %266 = vmatprep.subr.mxu0 0.0
    %267 = vmatpush2.msra.mxu0 0.0
    %268 = vmatprep.subr.mxu0 0.0
    %269 = vmatpush2.msra.mxu0 0.0
    %270 = vmatprep.subr.mxu0 0.0
    %271 = vmatpush2.msra.mxu0 0.0
    %272 = vmatprep.subr.mxu0 0.0
    %273 = vmatpush2.msra.mxu0 0.0
    %274 = vmatprep.subr.mxu0 0.0
    %275 = vmatpush2.msra.mxu0 0.0
    %276 = vmatprep.subr.mxu0 0.0
    %277 = vmatpush2.msra.mxu0 0.0
    %278 = vmatprep.subr.mxu0 0.0
    %279 = vmatpush2.msra.mxu0 0.0
    %280 = vmatprep.subr.mxu0 0.0
    %281 = vmatpush2.msra.mxu0 0.0
    %282 = vmatprep.subr.mxu0 0.0
    %283 = vmatpush2.msra.mxu0 0.0
    %284 = vmatprep.subr.mxu0 0.0
    %285 = vmatpush2.msra.mxu0 0.0
    %286 = vmatprep.subr.mxu0 0.0
    %287 = vmatpush2.msra.mxu0 0.0
    %288 = vmatprep.subr.mxu0 0.0
    %289 = vmatpush2.msra.mxu0 0.0
    %290 = vmatprep.subr.mxu0 0.0
    %291 = vmatpush2.msra.mxu0 0.0
    %292 = vmatprep.subr.mxu0 0.0
    %293 = vmatpush2.msra.mxu0 0.0
    %294 = vmatprep.subr.mxu0 0.0
    %295 = vmatpush2.msra.mxu0 0.0
    %296 = vmatprep.mubr.f32.mxu0 0.0
    %297 = vmatmul.mubr.f32.gmra.mxu0 %v230
    %v298 = vpop.f32.mrf.mxu0
    %v299 = vadd.f32 %v226, %v298
    %v300 = vpop.f32.mrf.mxu0
    %301 = vdwg.mxu0
    %v302 = vmax.f32 %v299, 0.0
    %v303 = vadd.f32 %v302, %v172
    %305 = vrot.lane.b32.xlu0 %v303, 1
    %v306 = vpop.permute.xlu0 %305
    %308 = vst.msk [vmem:[#allocation2] sm:$0xff] %vm177, %v306
    %309 = vrot.lane.b32.xlu0 %v303, 3
    %v310 = vpop.permute.xlu0 %309
    %312 = vst.msk [vmem:[#allocation2] sm:$0xff] %vm182, %v310
    %v313 = vld [vmem:[#allocation2] sm:$0xff]
    %314 = vst.msk [vmem:[#allocation3] sm:$0xff] %vm185, %v313
    %v315 = vld [vmem:[#allocation2] sm:$0xff]
    %317 = vrot.lane.b32.xlu0 %v315, 126
    %v318 = vpop.permute.xlu0 %317
    %320 = vst.msk [vmem:[#allocation3] sm:$0xff] %vm192, %v318
    %v321 = vld [vmem:[#allocation2] sm:$0xff]
    %323 = vrot.lane.b32.xlu0 %v321, 127
    %v324 = vpop.permute.xlu0 %323
    %326 = vst.msk [vmem:[#allocation3 + $0x8] sm:$0xff] %vm185, %v324
    %v327 = vld [vmem:[#allocation2] sm:$0xff]
    %329 = vrot.lane.b32.xlu0 %v327, 125
    %v330 = vpop.permute.xlu0 %329
    %332 = vst.msk [vmem:[#allocation3 + $0x8] sm:$0xff] %vm192, %v330
    %v333 = vld [vmem:[#allocation2] sm:$0xff]
    %335 = vrot.lane.b32.xlu0 %v333, 126
    %v336 = vpop.permute.xlu0 %335
    %338 = vst.msk [vmem:[#allocation3 + $0x10] sm:$0xff] %vm185, %v336
    %v339 = vld [vmem:[#allocation2] sm:$0xff]
    %341 = vrot.lane.b32.xlu0 %v339, 124
    %v342 = vpop.permute.xlu0 %341
    %344 = vst.msk [vmem:[#allocation3 + $0x10] sm:$0xff] %vm192, %v342
    %v345 = vld [vmem:[%s6] sm:$0xff]
    %v346 = vld [vmem:[%s7] sm:$0xff]
    %v347 = vld [vmem:[#allocation3] sm:$0xff]
    %v348 = vld [vmem:[#allocation3 + $0x8] sm:$0xff]
    %v349 = vld [vmem:[#allocation3 + $0x10] sm:$0xff]
    %351 = vset.pattern.permute.xlu0 0
    %352 = vperm.xlu0 %351, %v346
    %v353 = vpop.permute.xlu0 %352
    %v356 = vsel %vm228, %v345, 0
    %358 = vmatprep.subr.mxu0 0.0
    %359 = vmatpush1.msra.mxu0 0.0
    %360 = vmatprep.subr.mxu0 0.0
    %361 = vmatpush1.msra.mxu0 0.0
    %362 = vmatprep.subr.mxu0 0.0
    %363 = vmatpush1.msra.mxu0 0.0
    %364 = vmatprep.subr.mxu0 0.0
    %365 = vmatpush1.msra.mxu0 0.0
    %366 = vmatprep.subr.mxu0 0.0
    %367 = vmatpush1.msra.mxu0 0.0
    %368 = vmatprep.subr.mxu0 0.0
    %369 = vmatpush1.msra.mxu0 0.0
    %370 = vmatprep.subr.mxu0 0.0
    %371 = vmatpush1.msra.mxu0 0.0
    %372 = vmatprep.subr.mxu0 0.0
    %373 = vmatpush1.msra.mxu0 0.0
    %374 = vmatprep.subr.mxu0 0.0
    %375 = vmatpush1.msra.mxu0 0.0
    %376 = vmatprep.subr.mxu0 0.0
    %377 = vmatpush1.msra.mxu0 0.0
    %378 = vmatprep.subr.mxu0 0.0
    %379 = vmatpush1.msra.mxu0 0.0
    %380 = vmatprep.subr.mxu0 0.0
    %381 = vmatpush1.msra.mxu0 0.0
    %382 = vmatprep.subr.mxu0 0.0
    %383 = vmatpush1.msra.mxu0 0.0
    %384 = vmatprep.subr.mxu0 0.0
    %385 = vmatpush1.msra.mxu0 %v349
    %386 = vmatprep.subr.mxu0 0.0
    %387 = vmatpush1.msra.mxu0 %v348
    %388 = vmatprep.subr.mxu0 0.0
    %389 = vmatpush1.msra.mxu0 %v347
    %390 = vmatprep.subr.mxu0 0.0
    %391 = vmatpush2.msra.mxu0 0.0
    %392 = vmatprep.subr.mxu0 0.0
    %393 = vmatpush2.msra.mxu0 0.0
    %394 = vmatprep.subr.mxu0 0.0
    %395 = vmatpush2.msra.mxu0 0.0
    %396 = vmatprep.subr.mxu0 0.0
    %397 = vmatpush2.msra.mxu0 0.0
    %398 = vmatprep.subr.mxu0 0.0
    %399 = vmatpush2.msra.mxu0 0.0
    %400 = vmatprep.subr.mxu0 0.0
    %401 = vmatpush2.msra.mxu0 0.0
    %402 = vmatprep.subr.mxu0 0.0
    %403 = vmatpush2.msra.mxu0 0.0
    %404 = vmatprep.subr.mxu0 0.0
    %405 = vmatpush2.msra.mxu0 0.0
    %406 = vmatprep.subr.mxu0 0.0
    %407 = vmatpush2.msra.mxu0 0.0
    %408 = vmatprep.subr.mxu0 0.0
    %409 = vmatpush2.msra.mxu0 0.0
    %410 = vmatprep.subr.mxu0 0.0
    %411 = vmatpush2.msra.mxu0 0.0
    %412 = vmatprep.subr.mxu0 0.0
    %413 = vmatpush2.msra.mxu0 0.0
    %414 = vmatprep.subr.mxu0 0.0
    %415 = vmatpush2.msra.mxu0 0.0
    %416 = vmatprep.subr.mxu0 0.0
    %417 = vmatpush2.msra.mxu0 0.0
    %418 = vmatprep.subr.mxu0 0.0
    %419 = vmatpush2.msra.mxu0 0.0
    %420 = vmatprep.subr.mxu0 0.0
    %421 = vmatpush2.msra.mxu0 0.0
    %422 = vmatprep.mubr.f32.mxu0 0.0
    %423 = vmatmul.mubr.f32.gmra.mxu0 %v356
    %v424 = vpop.f32.mrf.mxu0
    %v425 = vadd.f32 %v353, %v424
    %v426 = vpop.f32.mrf.mxu0
    %427 = vdwg.mxu0
    %v428 = vadd.f32 %v425, %v303
    %vm429 = vcmask 261120
    %430 = vst.msk [vmem:[#allocation4] sm:$0xff] %vm429, %v428
    // Predicated region
    $region34: #{tpu_custom_call.1} parent=1 // pred_check
      _
    $region35: #{tpu_custom_call.1} parent=1 // pred_check_branch
      %432 = sbr.rel (0) target = $region37
    $region36: #{tpu_custom_call.1} parent=1 // pred_region
      %s434 = ssub.s32 128, 128
      %435 = vsyncadd [#allocation5], %s434
      %s437 = sshll.u32 [#allocation4], 4
      %s438 = int_to_ptr.vmem [resolvable:$true] %s437
      %440 = dma.vmem_to_hbm [thread:$0]  %s438, 128, %s8, [#allocation5]
    $region37: #{tpu_custom_call.1} parent=1 // pred_fallthru
      _
    // Predicated region
    $region38: #{tpu_custom_call.1} parent=1 // pred_check
      _
    $region39: #{tpu_custom_call.1} parent=1 // pred_check_branch
      %442 = sbr.rel (0) target = $region41
    $region40: #{tpu_custom_call.1} parent=1 // pred_region
      %443 = dma.done [#allocation5], 128
    $region41: #{tpu_custom_call.1} parent=1 // pred_fallthru
      _
    %444 = vsyncpa [#allocation5], 1

</llo_original>
